<compile_context>
chip_gen: v7x
topology: tpu7x:2x2x1
jax: 0.10.0
libtpu: 0.0.40
codegen_flags: <defaults>
</compile_context>

<pallas_src>
import functools
import jax
import jax.numpy as jnp
from jax.experimental import pallas as pl
from jax.experimental.pallas import tpu as pltpu


# ----------------------------------------------------------------------------
# Kernels
# ----------------------------------------------------------------------------
def _embed_kernel(p_ref, w_ref, b_ref, cls_ref, pos_ref, o_ref):
    # p_ref: (bt, N, CPP) f32, w_ref: (CPP, E) bf16, b_ref/cls_ref: (1, E) f32,
    # pos_ref: (T, E) f32, o_ref: (bt, T, E) f32   (T = N + 1)
    bt, N, CPP = p_ref.shape
    E = w_ref.shape[1]
    p = p_ref[...].reshape(bt * N, CPP).astype(jnp.bfloat16)
    emb = jnp.dot(p, w_ref[...], preferred_element_type=jnp.float32) + b_ref[...]
    emb = emb.reshape(bt, N, E)
    cls = jnp.broadcast_to(cls_ref[...][None], (bt, 1, E))
    o_ref[...] = jnp.concatenate([cls, emb], axis=1) + pos_ref[...][None]


def _blocks_kernel(x_ref, ln1w_ref, ln1b_ref, wqkv_ref, wout_ref, bout_ref,
                   ln2w_ref, ln2b_ref, w1_ref, b1_ref, w2_ref, b2_ref,
                   o_ref, *, num_heads):
    # One transformer layer per step of the (inner, "arbitrary") depth grid
    # axis.  The (bt, T, E) token tile is VMEM-resident across all layers.
    @pl.when(pl.program_id(1) == 0)
    def _():
        o_ref[...] = x_ref[...]

    x = o_ref[...]                                   # (bt, T, E) f32
    bt, T, E = x.shape
    H = num_heads
    hd = E // H
    scale = hd ** (-0.5)
    eps = 1e-5

    def layer_norm(v, wr, br):                       # f32 statistics
        mu = jnp.mean(v, axis=-1, keepdims=True)
        var = jnp.mean(jnp.square(v - mu), axis=-1, keepdims=True)
        return (v - mu) * jax.lax.rsqrt(var + eps) * wr[0] + br[0]

    xf = x.reshape(bt * T, E)                        # fill MXU M-dim

    # ---- multi-head self attention (heads batched in one einsum) ----
    h_in = layer_norm(xf, ln1w_ref, ln1b_ref).astype(jnp.bfloat16)
    # wqkv columns were pre-permuted at pack time to (H, 3, hd) order.
    qkv = jnp.dot(h_in, wqkv_ref[0], preferred_element_type=jnp.float32)
    qkv = qkv.reshape(bt, T, 3 * E)
    attn_rows = []
    for i in range(bt):                              # small static batch tile
        qkv_i = pltpu.einshape("mhd->hmd", qkv[i].reshape(T, H, 3 * hd))
        q = qkv_i[:, :, 0 * hd:1 * hd].astype(jnp.bfloat16)   # (H, T, hd)
        k = qkv_i[:, :, 1 * hd:2 * hd].astype(jnp.bfloat16)
        v = qkv_i[:, :, 2 * hd:3 * hd].astype(jnp.bfloat16)
        # Q K^T via contracting dims (no explicit transpose), heads batched.
        s = jnp.einsum("htd,hsd->hts", q, k,
                       preferred_element_type=jnp.float32) * scale
        s = s - jnp.max(s, axis=-1, keepdims=True)
        e = jnp.exp(s)
        p = e * pl.reciprocal(jnp.sum(e, axis=-1, keepdims=True), approx=True)
        o_i = jnp.einsum("hts,hsd->htd", p.astype(jnp.bfloat16), v,
                         preferred_element_type=jnp.float32)  # (H, T, hd)
        attn_rows.append(pltpu.einshape("htd->thd", o_i).reshape(T, E))
    attn = jnp.stack(attn_rows, axis=0).reshape(bt * T, E)
    attn = jnp.dot(attn.astype(jnp.bfloat16), wout_ref[0],
                   preferred_element_type=jnp.float32) + bout_ref[0]
    xf = xf + attn                                   # residual 1 (dropout = id)

    # ---- MLP ----
    h_mid = layer_norm(xf, ln2w_ref, ln2b_ref).astype(jnp.bfloat16)
    h_mid = jnp.dot(h_mid, w1_ref[0], preferred_element_type=jnp.float32) + b1_ref[0]
    h_mid = jax.nn.gelu(h_mid, approximate=False)    # exact erf GELU
    h_mid = jnp.dot(h_mid.astype(jnp.bfloat16), w2_ref[0],
                    preferred_element_type=jnp.float32) + b2_ref[0]
    xf = xf + h_mid                                  # residual 2 (dropout = id)

    o_ref[...] = xf.reshape(bt, T, E)


def _head_kernel(x_ref, lnw_ref, lnb_ref, wh_ref, bh_ref, o_ref):
    # x_ref: (B, E) cls tokens; wh_ref: (E, Cpad) bf16; o_ref: (B, Cpad) f32
    x = x_ref[...]
    eps = 1e-5
    mu = jnp.mean(x, axis=-1, keepdims=True)
    var = jnp.mean(jnp.square(x - mu), axis=-1, keepdims=True)
    xn = (x - mu) * jax.lax.rsqrt(var + eps) * lnw_ref[...] + lnb_ref[...]
    o_ref[...] = jnp.dot(xn.astype(jnp.bfloat16), wh_ref[...],
                         preferred_element_type=jnp.float32) + bh_ref[...]


# ----------------------------------------------------------------------------
# Parameter construction (deterministic, PyTorch-style layouts)
# ----------------------------------------------------------------------------
def init_params(key, *, img_size, patch_size, in_channels, num_classes,
                embed_dim, depth, num_heads, mlp_dim):
    num_patches = (img_size // patch_size) ** 2
    keys = jax.random.split(key, 8 + depth * 8)
    ki = iter(range(len(keys)))

    def randn(k, shape, scale=0.02):
        return scale * jax.random.normal(keys[k], shape, dtype=jnp.float32)

    params = {
        "proj_w": randn(next(ki), (embed_dim, in_channels, patch_size, patch_size)),
        "proj_b": jnp.zeros((embed_dim,), jnp.float32),
        "cls": jnp.zeros((1, 1, embed_dim), jnp.float32),
        "pos": jax.random.normal(keys[next(ki)], (1, 1 + num_patches, embed_dim),
                                 dtype=jnp.float32),
        "norm_w": jnp.ones((embed_dim,), jnp.float32),
        "norm_b": jnp.zeros((embed_dim,), jnp.float32),
        "head_w": randn(next(ki), (num_classes, embed_dim)),
        "head_b": jnp.zeros((num_classes,), jnp.float32),
        "blocks": [],
    }
    for _ in range(depth):
        blk = {
            "ln1_w": jnp.ones((embed_dim,), jnp.float32),
            "ln1_b": jnp.zeros((embed_dim,), jnp.float32),
            "qkv_w": randn(next(ki), (3 * embed_dim, embed_dim)),
            "out_w": randn(next(ki), (embed_dim, embed_dim)),
            "out_b": jnp.zeros((embed_dim,), jnp.float32),
            "ln2_w": jnp.ones((embed_dim,), jnp.float32),
            "ln2_b": jnp.zeros((embed_dim,), jnp.float32),
            "mlp_w1": randn(next(ki), (mlp_dim, embed_dim)),
            "mlp_b1": jnp.zeros((mlp_dim,), jnp.float32),
            "mlp_w2": randn(next(ki), (embed_dim, mlp_dim)),
            "mlp_b2": jnp.zeros((embed_dim,), jnp.float32),
        }
        params["blocks"].append(blk)
    return params


def pack_params(params, *, num_heads):
    """One-time weight re-layout: stack across depth, pre-transpose to
    (in, out), reorder qkv columns to (H, 3, hd), cast matmul weights to bf16,
    pad the classifier to a 128-lane tile."""
    E, C, P, _ = params["proj_w"].shape
    CPP = C * P * P
    H = num_heads
    hd = E // H
    blocks = params["blocks"]
    M = blocks[0]["mlp_w1"].shape[0]
    nc = params["head_w"].shape[0]
    Cp = max(128, ((nc + 127) // 128) * 128)

    def stack(fn):
        return jnp.stack([fn(b) for b in blocks], axis=0)

    def qkv_pack(b):
        # torch (3E, E) -> (E, 3E); columns reordered (3, H, hd) -> (H, 3, hd)
        w = b["qkv_w"].T.reshape(E, 3, H, hd).transpose(0, 2, 1, 3)
        return w.reshape(E, 3 * E).astype(jnp.bfloat16)

    return {
        "proj_w": params["proj_w"].reshape(E, CPP).T.astype(jnp.bfloat16),
        "proj_b": params["proj_b"].reshape(1, E),
        "cls": params["cls"].reshape(1, E),
        "pos": params["pos"].reshape(-1, E),
        "ln1_w": stack(lambda b: b["ln1_w"].reshape(1, E)),
        "ln1_b": stack(lambda b: b["ln1_b"].reshape(1, E)),
        "qkv_w": stack(qkv_pack),
        "out_w": stack(lambda b: b["out_w"].T.astype(jnp.bfloat16)),
        "out_b": stack(lambda b: b["out_b"].reshape(1, E)),
        "ln2_w": stack(lambda b: b["ln2_w"].reshape(1, E)),
        "ln2_b": stack(lambda b: b["ln2_b"].reshape(1, E)),
        "mlp_w1": stack(lambda b: b["mlp_w1"].T.astype(jnp.bfloat16)),
        "mlp_b1": stack(lambda b: b["mlp_b1"].reshape(1, M)),
        "mlp_w2": stack(lambda b: b["mlp_w2"].T.astype(jnp.bfloat16)),
        "mlp_b2": stack(lambda b: b["mlp_b2"].reshape(1, E)),
        "norm_w": params["norm_w"].reshape(1, E),
        "norm_b": params["norm_b"].reshape(1, E),
        "head_w": jnp.zeros((E, Cp), jnp.bfloat16).at[:, :nc].set(
            params["head_w"].T.astype(jnp.bfloat16)),
        "head_b": jnp.zeros((1, Cp), jnp.float32).at[:, :nc].set(
            params["head_b"].reshape(1, nc)),
    }


# ----------------------------------------------------------------------------
# Forward pass
# ----------------------------------------------------------------------------
def _pick_batch_tile(batch, tokens, max_rows=256):
    bt = max(1, min(batch, max_rows // max(tokens, 1)))
    while batch % bt:
        bt -= 1
    return bt


def vit_forward(x, pk, *, patch_size, num_heads, num_classes):
    B, C, Himg, Wimg = x.shape
    P = patch_size
    nP = Himg // P
    N = nP * nP
    T = N + 1
    CPP = C * P * P
    E = pk["proj_w"].shape[1]
    M = pk["mlp_w1"].shape[2]
    L = pk["qkv_w"].shape[0]
    Cp = pk["head_w"].shape[1]

    bt = _pick_batch_tile(B, T)
    nb = B // bt
    vmem = 64 * 1024 * 1024

    # --- patch extraction (stride==kernel conv == per-patch matmul) ---
    patches = (x.reshape(B, C, nP, P, nP, P)
                 .transpose(0, 2, 4, 1, 3, 5)
                 .reshape(B, N, CPP))

    # --- patch embed + cls token + positional embedding, fused ---
    tokens = pl.pallas_call(
        _embed_kernel,
        out_shape=jax.ShapeDtypeStruct((B, T, E), jnp.float32),
        grid=(nb,),
        in_specs=[pl.BlockSpec((bt, N, CPP), lambda b: (b, 0, 0)),
                  pl.BlockSpec((CPP, E), lambda b: (0, 0)),
                  pl.BlockSpec((1, E), lambda b: (0, 0)),
                  pl.BlockSpec((1, E), lambda b: (0, 0)),
                  pl.BlockSpec((T, E), lambda b: (0, 0))],
        out_specs=pl.BlockSpec((bt, T, E), lambda b: (b, 0, 0)),
        compiler_params=pltpu.CompilerParams(
            dimension_semantics=("parallel",), vmem_limit_bytes=vmem),
    )(patches, pk["proj_w"], pk["proj_b"], pk["cls"], pk["pos"])

    # --- all transformer blocks fused into one pallas_call ---
    tmap = lambda b, l: (b, 0, 0)       # token tile: resident across depth
    wmap = lambda b, l: (l, 0, 0)       # weights: indexed by depth

    tokens = pl.pallas_call(
        functools.partial(_blocks_kernel, num_heads=num_heads),
        out_shape=jax.ShapeDtypeStruct((B, T, E), jnp.float32),
        grid=(nb, L),
        in_specs=[pl.BlockSpec((bt, T, E), tmap),
                  pl.BlockSpec((1, 1, E), wmap),       # ln1_w
                  pl.BlockSpec((1, 1, E), wmap),       # ln1_b
                  pl.BlockSpec((1, E, 3 * E), wmap),   # qkv_w (bf16)
                  pl.BlockSpec((1, E, E), wmap),       # out_w (bf16)
                  pl.BlockSpec((1, 1, E), wmap),       # out_b
                  pl.BlockSpec((1, 1, E), wmap),       # ln2_w
                  pl.BlockSpec((1, 1, E), wmap),       # ln2_b
                  pl.BlockSpec((1, E, M), wmap),       # mlp_w1 (bf16)
                  pl.BlockSpec((1, 1, M), wmap),       # mlp_b1
                  pl.BlockSpec((1, M, E), wmap),       # mlp_w2 (bf16)
                  pl.BlockSpec((1, 1, E), wmap)],      # mlp_b2
        out_specs=pl.BlockSpec((bt, T, E), tmap),
        compiler_params=pltpu.CompilerParams(
            dimension_semantics=("parallel", "arbitrary"),
            vmem_limit_bytes=vmem),
    )(tokens, pk["ln1_w"], pk["ln1_b"], pk["qkv_w"], pk["out_w"], pk["out_b"],
      pk["ln2_w"], pk["ln2_b"], pk["mlp_w1"], pk["mlp_b1"], pk["mlp_w2"],
      pk["mlp_b2"])

    # --- final LayerNorm (per-token) on the cls token + classifier head ---
    cls_final = tokens[:, 0, :]                       # (B, E)
    zmap = lambda i: (0, 0)
    logits_pad = pl.pallas_call(
        _head_kernel,
        out_shape=jax.ShapeDtypeStruct((B, Cp), jnp.float32),
        grid=(1,),
        in_specs=[pl.BlockSpec((B, E), zmap),
                  pl.BlockSpec((1, E), zmap),
                  pl.BlockSpec((1, E), zmap),
                  pl.BlockSpec((E, Cp), zmap),
                  pl.BlockSpec((1, Cp), zmap)],
        out_specs=pl.BlockSpec((B, Cp), zmap),
        compiler_params=pltpu.CompilerParams(
            dimension_semantics=("arbitrary",), vmem_limit_bytes=vmem),
    )(cls_final, pk["norm_w"], pk["norm_b"], pk["head_w"], pk["head_b"])

    return logits_pad[:, :num_classes]                # drop the lane padding


# ----------------------------------------------------------------------------
if __name__ == "__main__":
    # small, shape-consistent config
    IMG, PATCH, CIN, NCLS = 16, 4, 4, 10
    EMBED, DEPTH, HEADS, MLP = 32, 2, 2, 64
    BATCH = 2

    key = jax.random.PRNGKey(0)
    kx, kp = jax.random.split(key)
    x = jax.random.normal(kx, (BATCH, CIN, IMG, IMG), dtype=jnp.float32)
    params = init_params(kp, img_size=IMG, patch_size=PATCH, in_channels=CIN,
                         num_classes=NCLS, embed_dim=EMBED, depth=DEPTH,
                         num_heads=HEADS, mlp_dim=MLP)
    packed = pack_params(params, num_heads=HEADS)     # one-time weight re-layout

    logits = vit_forward(x, packed, patch_size=PATCH, num_heads=HEADS,
                         num_classes=NCLS)
    jax.block_until_ready(logits)
    assert logits.shape == (BATCH, NCLS)
    # TODO(synk): dropout is treated as identity (eval mode); no RNG dropout kernel.
    print("KERNEL_OK")
</pallas_src>

<mosaic_0001>
module attributes {stable_mosaic.version = 11 : i64} {
  func.func @_embed_kernel(%arg0: i32, %arg1: memref<2x16x64xf32, #tpu.memory_space<vmem>>, %arg2: memref<64x32xbf16, #tpu.memory_space<vmem>>, %arg3: memref<1x32xf32, #tpu.memory_space<vmem>>, %arg4: memref<1x32xf32, #tpu.memory_space<vmem>>, %arg5: memref<17x32xf32, #tpu.memory_space<vmem>>, %arg6: memref<2x17x32xf32, #tpu.memory_space<vmem>>) attributes {dimension_semantics = [#tpu.dimension_semantics<parallel>], iteration_bounds = array<i64: 1>, scalar_prefetch = 0 : i64, scratch_operands = 0 : i64, tpu.core_type = #tpu.core_type<tc>, window_params = [{transform_indices = @transform_0, window_bounds = array<i64: 2, 16, 64>}, {pipeline_mode = #tpu.pipeline_mode<synchronous>, transform_indices = @transform_1, window_bounds = array<i64: 64, 32>}, {pipeline_mode = #tpu.pipeline_mode<synchronous>, transform_indices = @transform_2, window_bounds = array<i64: 1, 32>}, {pipeline_mode = #tpu.pipeline_mode<synchronous>, transform_indices = @transform_3, window_bounds = array<i64: 1, 32>}, {pipeline_mode = #tpu.pipeline_mode<synchronous>, transform_indices = @transform_4, window_bounds = array<i64: 17, 32>}, {transform_indices = @transform_5, window_bounds = array<i64: 2, 17, 32>}]} {
    %c0 = arith.constant 0 : index
    %c0_0 = arith.constant 0 : index
    %c0_1 = arith.constant 0 : index
    %0 = vector.load %arg1[%c0, %c0_0, %c0_1] : memref<2x16x64xf32, #tpu.memory_space<vmem>>, vector<2x16x64xf32>
    %1 = vector.shape_cast %0 : vector<2x16x64xf32> to vector<32x64xf32>
    %2 = arith.truncf %1 : vector<32x64xf32> to vector<32x64xbf16>
    %c0_2 = arith.constant 0 : index
    %c0_3 = arith.constant 0 : index
    %3 = vector.load %arg2[%c0_2, %c0_3] : memref<64x32xbf16, #tpu.memory_space<vmem>>, vector<64x32xbf16>
    %cst = arith.constant dense<0.000000e+00> : vector<32x32xf32>
    %4 = tpu.matmul %2, %3, %cst {dimension_numbers = #tpu.dot_dimension_numbers<[1], [0], [0], [1], [0, 0, 1, 1], [], []>} : vector<32x64xbf16>, vector<64x32xbf16>, vector<32x32xf32> -> vector<32x32xf32>
    %c0_4 = arith.constant 0 : index
    %c0_5 = arith.constant 0 : index
    %5 = vector.load %arg3[%c0_4, %c0_5] : memref<1x32xf32, #tpu.memory_space<vmem>>, vector<1x32xf32>
    %6 = vector.broadcast %5 : vector<1x32xf32> to vector<32x32xf32>
    %7 = arith.addf %4, %6 : vector<32x32xf32>
    %8 = vector.shape_cast %7 : vector<32x32xf32> to vector<2x16x32xf32>
    %c0_6 = arith.constant 0 : index
    %c0_7 = arith.constant 0 : index
    %9 = vector.load %arg4[%c0_6, %c0_7] : memref<1x32xf32, #tpu.memory_space<vmem>>, vector<1x32xf32>
    %10 = vector.shape_cast %9 : vector<1x32xf32> to vector<1x1x32xf32>
    %11 = vector.shape_cast %10 : vector<1x1x32xf32> to vector<1x1x32xf32>
    %12 = vector.broadcast %11 : vector<1x1x32xf32> to vector<2x1x32xf32>
    %13 = tpu.concatenate %12, %8 in 1 : vector<2x1x32xf32>, vector<2x16x32xf32> -> vector<2x17x32xf32>
    %c0_8 = arith.constant 0 : index
    %c0_9 = arith.constant 0 : index
    %14 = vector.load %arg5[%c0_8, %c0_9] : memref<17x32xf32, #tpu.memory_space<vmem>>, vector<17x32xf32>
    %15 = vector.shape_cast %14 : vector<17x32xf32> to vector<1x17x32xf32>
    %16 = vector.broadcast %15 : vector<1x17x32xf32> to vector<2x17x32xf32>
    %17 = arith.addf %13, %16 : vector<2x17x32xf32>
    %c0_10 = arith.constant 0 : index
    %c0_11 = arith.constant 0 : index
    %c0_12 = arith.constant 0 : index
    %18 = vector.load %arg6[%c0_10, %c0_11, %c0_12] : memref<2x17x32xf32, #tpu.memory_space<vmem>>, vector<2x17x32xf32>
    tpu.vector_store %arg6[%c0_10, %c0_11, %c0_12], %17 {strides = array<i32>} : memref<2x17x32xf32, #tpu.memory_space<vmem>>, vector<2x17x32xf32>,
    return
  }
  func.func @transform_0(%arg0: i32) -> (i32, i32, i32) {
    %c0_i32 = arith.constant 0 : i32
    %c0_i32_0 = arith.constant 0 : i32
    %c0_i32_1 = arith.constant 0 : i32
    return %arg0, %c0_i32, %c0_i32_0 : i32, i32, i32
  }
  func.func @transform_1(%arg0: i32) -> (i32, i32) {
    %c0_i32 = arith.constant 0 : i32
    %c0_i32_0 = arith.constant 0 : i32
    %c0_i32_1 = arith.constant 0 : i32
    return %c0_i32, %c0_i32_0 : i32, i32
  }
  func.func @transform_2(%arg0: i32) -> (i32, i32) {
    %c0_i32 = arith.constant 0 : i32
    %c0_i32_0 = arith.constant 0 : i32
    %c0_i32_1 = arith.constant 0 : i32
    return %c0_i32, %c0_i32_0 : i32, i32
  }
  func.func @transform_3(%arg0: i32) -> (i32, i32) {
    %c0_i32 = arith.constant 0 : i32
    %c0_i32_0 = arith.constant 0 : i32
    %c0_i32_1 = arith.constant 0 : i32
    return %c0_i32, %c0_i32_0 : i32, i32
  }
  func.func @transform_4(%arg0: i32) -> (i32, i32) {
    %c0_i32 = arith.constant 0 : i32
    %c0_i32_0 = arith.constant 0 : i32
    %c0_i32_1 = arith.constant 0 : i32
    return %c0_i32, %c0_i32_0 : i32, i32
  }
  func.func @transform_5(%arg0: i32) -> (i32, i32, i32) {
    %c0_i32 = arith.constant 0 : i32
    %c0_i32_0 = arith.constant 0 : i32
    %c0_i32_1 = arith.constant 0 : i32
    return %arg0, %c0_i32, %c0_i32_0 : i32, i32, i32
  }
}

</mosaic_0001>

<llo_original>
// kernel: tpu_custom_call.1
$region0: #{tpu_custom_call.1}
  #allocation0 [shape = 'u32[]', space=smem, size = 0x4, offset = 0x4, fixed_abs, tag = 'smem constant byte address 0x4 - core index']
  #allocation1 [shape = 'u32[144,128]{1,0:T(1,128)}', space=vmem, size = 0x12000, scoped, tag = 'internal scratch']
  %s0 = inlined_call_operand.hbm [shape: f32[2,16,64], index: 0, kind: input, shape index: {}]
  %s1 = inlined_call_operand.hbm [shape: bf16[64,32], index: 1, kind: input, shape index: {}]
  %s2 = inlined_call_operand.hbm [shape: f32[1,32], index: 2, kind: input, shape index: {}]
  %s3 = inlined_call_operand.hbm [shape: f32[1,32], index: 3, kind: input, shape index: {}]
  %s4 = inlined_call_operand.hbm [shape: f32[17,32], index: 4, kind: input, shape index: {}]
  %s5 = inlined_call_operand.hbm [shape: f32[2,17,32], index: 5, kind: output, shape index: {}]
  %s6 = sld [smem:[#allocation0]]
  $region50: #{tpu_custom_call.1} parent=0
    _
  %s8 = ssub.s32 1, %s6
  %s9 = scalar_select 0, %s8, %s6
  $region1: #{tpu_custom_call.1} parent=0
    #allocation2 [shape = 'u8[16384]{0}', space=vmem, size = 0x4000, scoped, tag = 'input window, operand 0, single buffered']
    #allocation3 [shape = 's32[1]{0}', space=sflag, size = 0x4, scoped, tag = 'scoped memory for tpu_custom_call.1']
    #allocation4 [shape = 's32[1]{0}', space=sflag, size = 0x4, scoped, tag = 'scoped memory for tpu_custom_call.1']
    #allocation5 [shape = 'u8[16384]{0}', space=vmem, size = 0x4000, scoped, tag = 'input window, operand 1, single buffered']
    #allocation6 [shape = 's32[1]{0}', space=sflag, size = 0x4, scoped, tag = 'scoped memory for tpu_custom_call.1']
    #allocation7 [shape = 'u8[512]{0}', space=vmem, size = 0x400, scoped, tag = 'input window, operand 2, single buffered']
    #allocation8 [shape = 'u8[512]{0}', space=vmem, size = 0x400, scoped, tag = 'input window, operand 3, single buffered']
    #allocation9 [shape = 's32[1]{0}', space=sflag, size = 0x4, scoped, tag = 'scoped memory for tpu_custom_call.1']
    #allocation10 [shape = 'u8[12288]{0}', space=vmem, size = 0x3000, scoped, tag = 'input window, operand 4, single buffered']
    #allocation11 [shape = 'u8[24576]{0}', space=vmem, size = 0x6000, scoped, tag = 'output window, operand 0, single buffered']
    %10 = vsyncpa [#allocation3], 0
    %11 = vsyncpa [#allocation6], 0
    %12 = vsyncpa [#allocation9], 0
    %13 = vsyncpa [#allocation4], 0
    // Predicated region
    $region2: #{tpu_custom_call.1} parent=1 // pred_check
      _
    $region3: #{tpu_custom_call.1} parent=1 // pred_check_branch
      %15 = sbr.rel (0) target = $region5
    $region4: #{tpu_custom_call.1} parent=1 // pred_region
      %s17 = ssub.s32 512, 512
      %18 = vsyncadd [#allocation3], %s17
      %s19 = sshll.u32 [#allocation2], 4
      %s20 = int_to_ptr.vmem [resolvable:$true] %s19
      %25 = dma.hbm_to_vmem [thread:$0]  %s0, 512, %s20, [#allocation3], 128, 128, 8
    $region5: #{tpu_custom_call.1} parent=1 // pred_fallthru
      _
    // Predicated region
    $region6: #{tpu_custom_call.1} parent=1 // pred_check
      _
    $region7: #{tpu_custom_call.1} parent=1 // pred_check_branch
      %27 = sbr.rel (0) target = $region9
    $region8: #{tpu_custom_call.1} parent=1 // pred_region
      %s29 = ssub.s32 512, 512
      %30 = vsyncadd [#allocation6], %s29
      %s31 = sshll.u32 [#allocation5], 4
      %s32 = int_to_ptr.vmem [resolvable:$true] %s31
      %37 = dma.hbm_to_vmem [thread:$0]  %s1, 512, %s32, [#allocation6], 64, 64, 4
    $region9: #{tpu_custom_call.1} parent=1 // pred_fallthru
      _
    // Predicated region
    $region10: #{tpu_custom_call.1} parent=1 // pred_check
      _
    $region11: #{tpu_custom_call.1} parent=1 // pred_check_branch
      %39 = sbr.rel (0) target = $region13
    $region12: #{tpu_custom_call.1} parent=1 // pred_region
      %s41 = ssub.s32 16, 16
      %42 = vsyncadd [#allocation6], %s41
      %s44 = sshll.u32 [#allocation7], 4
      %s45 = int_to_ptr.vmem [resolvable:$true] %s44
      %47 = dma.hbm_to_vmem [thread:$0]  %s2, 16, %s45, [#allocation6]
    $region13: #{tpu_custom_call.1} parent=1 // pred_fallthru
      _
    // Predicated region
    $region14: #{tpu_custom_call.1} parent=1 // pred_check
      _
    $region15: #{tpu_custom_call.1} parent=1 // pred_check_branch
      %49 = sbr.rel (0) target = $region17
    $region16: #{tpu_custom_call.1} parent=1 // pred_region
      %s51 = ssub.s32 16, 16
      %52 = vsyncadd [#allocation9], %s51
      %s54 = sshll.u32 [#allocation8], 4
      %s55 = int_to_ptr.vmem [resolvable:$true] %s54
      %57 = dma.hbm_to_vmem [thread:$0]  %s3, 16, %s55, [#allocation9]
    $region17: #{tpu_custom_call.1} parent=1 // pred_fallthru
      _
    // Predicated region
    $region18: #{tpu_custom_call.1} parent=1 // pred_check
      _
    $region19: #{tpu_custom_call.1} parent=1 // pred_check_branch
      %59 = sbr.rel (0) target = $region21
    $region20: #{tpu_custom_call.1} parent=1 // pred_region
      %s61 = ssub.s32 384, 384
      %62 = vsyncadd [#allocation9], %s61
      %s63 = sshll.u32 [#allocation10], 4
      %s64 = int_to_ptr.vmem [resolvable:$true] %s63
      %69 = dma.hbm_to_vmem [thread:$0]  %s4, 384, %s64, [#allocation9], 128, 128, 8
    $region21: #{tpu_custom_call.1} parent=1 // pred_fallthru
      _
    // Predicated region
    $region22: #{tpu_custom_call.1} parent=1 // pred_check
      _
    $region23: #{tpu_custom_call.1} parent=1 // pred_check_branch
      %71 = sbr.rel (0) target = $region25
    $region24: #{tpu_custom_call.1} parent=1 // pred_region
      %72 = dma.done [#allocation3], 512
    $region25: #{tpu_custom_call.1} parent=1 // pred_fallthru
      _
    // Predicated region
    $region26: #{tpu_custom_call.1} parent=1 // pred_check
      _
    $region27: #{tpu_custom_call.1} parent=1 // pred_check_branch
      %74 = sbr.rel (0) target = $region29
    $region28: #{tpu_custom_call.1} parent=1 // pred_region
      %75 = dma.done [#allocation6], 512
    $region29: #{tpu_custom_call.1} parent=1 // pred_fallthru
      _
    // Predicated region
    $region30: #{tpu_custom_call.1} parent=1 // pred_check
      _
    $region31: #{tpu_custom_call.1} parent=1 // pred_check_branch
      %77 = sbr.rel (0) target = $region33
    $region32: #{tpu_custom_call.1} parent=1 // pred_region
      %78 = dma.done [#allocation6], 16
    $region33: #{tpu_custom_call.1} parent=1 // pred_fallthru
      _
    // Predicated region
    $region34: #{tpu_custom_call.1} parent=1 // pred_check
      _
    $region35: #{tpu_custom_call.1} parent=1 // pred_check_branch
      %80 = sbr.rel (0) target = $region37
    $region36: #{tpu_custom_call.1} parent=1 // pred_region
      %81 = dma.done [#allocation9], 16
    $region37: #{tpu_custom_call.1} parent=1 // pred_fallthru
      _
    // Predicated region
    $region38: #{tpu_custom_call.1} parent=1 // pred_check
      _
    $region39: #{tpu_custom_call.1} parent=1 // pred_check_branch
      %83 = sbr.rel (0) target = $region41
    $region40: #{tpu_custom_call.1} parent=1 // pred_region
      %84 = dma.done [#allocation9], 384
    $region41: #{tpu_custom_call.1} parent=1 // pred_fallthru
      _
    %v86 = vld [vmem:[#allocation2] sm:$0xff]
    %v87 = vld [vmem:[#allocation2 + $0x8] sm:$0xff]
    %v88 = vld [vmem:[#allocation2 + $0x10] sm:$0xff]
    %v89 = vld [vmem:[#allocation2 + $0x18] sm:$0xff]
    %v90 = vpack.c.bf16 %v87, %v86
    %v91 = vpack.c.bf16 %v89, %v88
    %v92 = vld [vmem:[#allocation5] sm:$0xf]
    %v93 = vld [vmem:[#allocation5 + $0x4] sm:$0xf]
    %v94 = vld [vmem:[#allocation5 + $0x8] sm:$0xf]
    %v95 = vld [vmem:[#allocation5 + $0xc] sm:$0xf]
    %v96 = vld [vmem:[#allocation5 + $0x10] sm:$0xf]
    %v97 = vld [vmem:[#allocation5 + $0x14] sm:$0xf]
    %v98 = vld [vmem:[#allocation5 + $0x18] sm:$0xf]
    %v99 = vld [vmem:[#allocation5 + $0x1c] sm:$0xf]
    %v100 = vld [vmem:[#allocation7] sm:$0x1]
    %v102 = vlaneseq
    %v103 = vshrl.u32 %v102, 7
    %v104 = vsub.s32 0, %v103
    %v105 = vrot.slane %v100, %v104
    %v115 = vunpack.c.l.b16 %v92
    %v116 = vunpack.c.l.b16 %v93
    %v117 = vunpack.c.l.b16 %v94
    %v118 = vunpack.c.l.b16 %v95
    %v119 = vunpack.c.l.b16 %v96
    %v120 = vunpack.c.l.b16 %v97
    %v121 = vunpack.c.l.b16 %v98
    %v122 = vunpack.c.l.b16 %v99
    %v123 = vpack.c.b16 %v116, %v115
    %v124 = vpack.c.b16 %v118, %v117
    %v125 = vpack.c.b16 %v120, %v119
    %v126 = vpack.c.b16 %v122, %v121
    %vm131 = vcmask 523264
    %v133 = vsel %vm131, %v90, 0
    %v136 = vsel %vm131, %v91, 0
    %138 = vmatprep.subr.bf16.mxu0 0
    %139 = vmatpush1.bf16.msra.mxu0 %v123
    %140 = vmatprep.subr.bf16.mxu0 0
    %141 = vmatpush1.bf16.msra.mxu0 %v124
    %142 = vmatprep.subr.bf16.mxu0 0
    %143 = vmatpush1.bf16.msra.mxu0 %v125
    %144 = vmatprep.subr.bf16.mxu0 0
    %145 = vmatpush1.bf16.msra.mxu0 %v126
    %146 = vmatprep.subr.bf16.mxu0 0
    %147 = vmatpush1.bf16.msra.mxu0 0
    %148 = vmatprep.subr.bf16.mxu0 0
    %149 = vmatpush1.bf16.msra.mxu0 0
    %150 = vmatprep.subr.bf16.mxu0 0
    %151 = vmatpush1.bf16.msra.mxu0 0
    %152 = vmatprep.subr.bf16.mxu0 0
    %153 = vmatpush1.bf16.msra.mxu0 0
    %154 = vmatprep.subr.bf16.mxu0 0
    %155 = vmatpush1.bf16.msra.mxu0 0
    %156 = vmatprep.subr.bf16.mxu0 0
    %157 = vmatpush1.bf16.msra.mxu0 0
    %158 = vmatprep.subr.bf16.mxu0 0
    %159 = vmatpush1.bf16.msra.mxu0 0
    %160 = vmatprep.subr.bf16.mxu0 0
    %161 = vmatpush1.bf16.msra.mxu0 0
    %162 = vmatprep.subr.bf16.mxu0 0
    %163 = vmatpush1.bf16.msra.mxu0 0
    %164 = vmatprep.subr.bf16.mxu0 0
    %165 = vmatpush1.bf16.msra.mxu0 0
    %166 = vmatprep.subr.bf16.mxu0 0
    %167 = vmatpush1.bf16.msra.mxu0 0
    %168 = vmatprep.subr.bf16.mxu0 0
    %169 = vmatpush1.bf16.msra.mxu0 0
    %170 = vmatprep.mubr.bf16.mxu0 0
    %171 = vmatmul.mubr.bf16.gmra.mrb[0].mxu0 %v133
    %v172 = vpop.f32.mrb[0].mxu0
    %v173 = vadd.f32 %v105, %v172
    %v174 = vpop.f32.mrb[0].mxu0
    %v175 = vpop.f32.mrb[0].mxu0
    %v176 = vadd.f32 %v105, %v175
    %v177 = vpop.f32.mrb[0].mxu0
    %178 = vmatprep.mubr.bf16.mxu0 0
    %179 = vmatmul.mubr.bf16.gmra.mrb[0].mxu0 %v136
    %v180 = vpop.f32.mrb[0].mxu0
    %v181 = vadd.f32 %v105, %v180
    %v182 = vpop.f32.mrb[0].mxu0
    %v183 = vpop.f32.mrb[0].mxu0
    %v184 = vadd.f32 %v105, %v183
    %v185 = vpop.f32.mrb[0].mxu0
    %186 = vdwg.mxu0
    %v187 = vld [vmem:[#allocation8] sm:$0x1]
    %vm192 = vcmask 1040384
    %v193 = vrot.slane %v173, 7
    %v194 = vrot.slane %v176, 7
    %v195 = vsel %vm192, %v193, %v194
    %v196 = vrot.slane %v181, 7
    %v197 = vrot.slane %v184, 7
    %v198 = vsel %vm192, %v196, %v197
    %v205 = vsel %vm192, %v187, %v193
    %v206 = vsel %vm192, %v187, %v196
    %v207 = vld [vmem:[#allocation10] sm:$0xff]
    %v208 = vld [vmem:[#allocation10 + $0x8] sm:$0xff]
    %v209 = vld [vmem:[#allocation10 + $0x10] sm:$0x1]
    %v210 = vadd.f32 %v205, %v207
    %v211 = vadd.f32 %v195, %v208
    %v212 = vadd.f32 %v194, %v209
    %v213 = vadd.f32 %v206, %v207
    %v214 = vadd.f32 %v198, %v208
    %v215 = vadd.f32 %v197, %v209
    %vm216 = vcmask 261120
    %217 = vst.msk [vmem:[#allocation11] sm:$0xff] %vm216, %v210
    %218 = vst.msk [vmem:[#allocation11 + $0x8] sm:$0xff] %vm216, %v211
    %vm219 = vcmask 253952
    %220 = vst.msk [vmem:[#allocation11 + $0x10] sm:$0x1] %vm219, %v212
    %221 = vst.msk [vmem:[#allocation11 + $0x18] sm:$0xff] %vm216, %v213
    %222 = vst.msk [vmem:[#allocation11 + $0x20] sm:$0xff] %vm216, %v214
    %223 = vst.msk [vmem:[#allocation11 + $0x28] sm:$0x1] %vm219, %v215
    // Predicated region
    $region42: #{tpu_custom_call.1} parent=1 // pred_check
      _
    $region43: #{tpu_custom_call.1} parent=1 // pred_check_branch
      %225 = sbr.rel (0) target = $region45
    $region44: #{tpu_custom_call.1} parent=1 // pred_region
      %s227 = ssub.s32 768, 768
      %228 = vsyncadd [#allocation4], %s227
      %s229 = sshll.u32 [#allocation11], 4
      %s230 = int_to_ptr.vmem [resolvable:$true] %s229
      %235 = dma.vmem_to_hbm [thread:$0]  %s230, 768, %s5, [#allocation4], 128, 128, 8
    $region45: #{tpu_custom_call.1} parent=1 // pred_fallthru
      _
    // Predicated region
    $region46: #{tpu_custom_call.1} parent=1 // pred_check
      _
    $region47: #{tpu_custom_call.1} parent=1 // pred_check_branch
      %237 = sbr.rel (0) target = $region49
    $region48: #{tpu_custom_call.1} parent=1 // pred_region
      %238 = dma.done [#allocation4], 768
    $region49: #{tpu_custom_call.1} parent=1 // pred_fallthru
      _
    %239 = vsyncpa [#allocation3], 1
    %240 = vsyncpa [#allocation6], 1
    %241 = vsyncpa [#allocation9], 1
    %242 = vsyncpa [#allocation4], 1

</llo_original>
